<compile_context>
chip_gen: v6e
topology: v6e:2x2x1
jax: 0.10.0
libtpu: 0.0.40
codegen_flags: <defaults>
</compile_context>

<pallas_src>
import jax
import jax.numpy as jnp
from jax.experimental import pallas as pl
from jax.experimental.pallas import tpu as pltpu

LANE = 128            # TPU lane width (last dim of every vreg)
MAX_TILE_ROWS = 2048  # rows of the lane-dense [rows, 128] layout per grid step


def nl_kernel(params_ref, x0_ref, x1_ref, o_ref):
    # params_ref : SMEM f32[5] = [w1_0, w1_1, b1, w2, b2]
    # x0_ref/x1_ref/o_ref : VMEM (tile_rows, 128)
    w1_0 = params_ref[0]
    w1_1 = params_ref[1]
    b1 = params_ref[2]
    w2 = params_ref[3]
    b2 = params_ref[4]

    # temp1 = X @ w1 + b1  (K=2 contraction as two VPU multiply-adds)
    temp1 = x0_ref[...] * w1_0 + x1_ref[...] * w1_1 + b1
    # temp2 = w2 * tanh(temp1) + b2   (tanh lands on the EUP slot)
    o_ref[...] = w2 * jnp.tanh(temp1) + b2


def nl_model_forward(X, w1, b1, w2, b2, *, max_tile_rows=MAX_TILE_ROWS):
    """NLModel forward. X: [N, 2] -> [N] float32 (matches torch.flatten)."""
    X = X.astype(jnp.float32)
    N = X.shape[0]

    # Lane-dense re-layout: pad N to a whole number of (tile_rows, 128) tiles.
    rows = pl.cdiv(N, LANE)
    if rows <= max_tile_rows:
        tile_rows = rows                  # single block == full array dims (always legal)
    else:
        tile_rows = max_tile_rows         # multiple of 8 -> legal (8,128) tile
    rows_padded = pl.cdiv(rows, tile_rows) * tile_rows
    n_padded = rows_padded * LANE

    x0 = jnp.zeros((n_padded,), jnp.float32).at[:N].set(X[:, 0]).reshape(rows_padded, LANE)
    x1 = jnp.zeros((n_padded,), jnp.float32).at[:N].set(X[:, 1]).reshape(rows_padded, LANE)

    # All (tiny) parameters as one SMEM scalar vector: [w1_0, w1_1, b1, w2, b2].
    params = jnp.concatenate([
        w1.reshape(-1).astype(jnp.float32),
        b1.reshape(-1).astype(jnp.float32),
        w2.reshape(-1).astype(jnp.float32),
        b2.reshape(-1).astype(jnp.float32),
    ])

    grid = (rows_padded // tile_rows,)
    # index_maps receive the scalar-prefetch ref as a trailing positional arg.
    tile_spec = pl.BlockSpec((tile_rows, LANE), lambda i, params: (i, 0))

    out = pl.pallas_call(
        nl_kernel,
        out_shape=jax.ShapeDtypeStruct((rows_padded, LANE), jnp.float32),
        grid_spec=pltpu.PrefetchScalarGridSpec(
            num_scalar_prefetch=1,
            grid=grid,
            in_specs=[tile_spec, tile_spec],
            out_specs=tile_spec,
        ),
        compiler_params=pltpu.CompilerParams(
            dimension_semantics=("parallel",),   # embarrassingly parallel batch axis
        ),
    )(params, x0, x1)

    # Drop padding and flatten (torch.flatten of the [N, 1] result).
    return out.reshape(-1)[:N]


if __name__ == "__main__":
    key = jax.random.PRNGKey(0)
    k_x, k_w1, k_b1, k_w2, k_b2 = jax.random.split(key, 5)

    # Deterministic parameter init (shapes from NLModel.__init__)
    w1 = jax.random.normal(k_w1, (2, 1), dtype=jnp.float32)
    b1 = jax.random.normal(k_b1, (1,), dtype=jnp.float32)
    w2 = jax.random.normal(k_w2, (1, 1), dtype=jnp.float32)
    b2 = jax.random.normal(k_b2, (1,), dtype=jnp.float32)

    # Small shapes: N=8 (as in the lab) plus N=300 to exercise lane padding.
    for N in (8, 300):
        X = jax.random.normal(jax.random.fold_in(k_x, N), (N, 2), dtype=jnp.float32)
        res = nl_model_forward(X, w1, b1, w2, b2)
        res = jax.block_until_ready(res)

        # Pure-JAX f32 reference of the same math.
        ref = (w2 * jnp.tanh(X @ w1 + b1) + b2).reshape(-1)
        assert res.shape == (N,), (res.shape, N)
        assert jnp.allclose(res, ref, atol=1e-5, rtol=1e-5), (N, res, ref)

    print("KERNEL_OK")
</pallas_src>

<mosaic_0001>
module attributes {stable_mosaic.version = 11 : i64} {
  func.func @nl_kernel(%arg0: i32, %arg1: memref<5xf32, #tpu.memory_space<smem>>, %arg2: memref<1x128xf32, #tpu.memory_space<vmem>>, %arg3: memref<1x128xf32, #tpu.memory_space<vmem>>, %arg4: memref<1x128xf32, #tpu.memory_space<vmem>>) attributes {dimension_semantics = [#tpu.dimension_semantics<parallel>], iteration_bounds = array<i64: 1>, scalar_prefetch = 1 : i64, scratch_operands = 0 : i64, tpu.core_type = #tpu.core_type<tc>, window_params = [{transform_indices = @transform_0, window_bounds = array<i64: 1, 128>}, {transform_indices = @transform_1, window_bounds = array<i64: 1, 128>}, {transform_indices = @transform_2, window_bounds = array<i64: 1, 128>}]} {
    %c0 = arith.constant 0 : index
    %0 = memref.load %arg1[%c0] : memref<5xf32, #tpu.memory_space<smem>>
    %c1 = arith.constant 1 : index
    %1 = memref.load %arg1[%c1] : memref<5xf32, #tpu.memory_space<smem>>
    %c2 = arith.constant 2 : index
    %2 = memref.load %arg1[%c2] : memref<5xf32, #tpu.memory_space<smem>>
    %c3 = arith.constant 3 : index
    %3 = memref.load %arg1[%c3] : memref<5xf32, #tpu.memory_space<smem>>
    %c4 = arith.constant 4 : index
    %4 = memref.load %arg1[%c4] : memref<5xf32, #tpu.memory_space<smem>>
    %c0_0 = arith.constant 0 : index
    %c0_1 = arith.constant 0 : index
    %5 = vector.load %arg2[%c0_0, %c0_1] : memref<1x128xf32, #tpu.memory_space<vmem>>, vector<1x128xf32>
    %6 = vector.broadcast %0 : f32 to vector<1x128xf32>
    %7 = arith.mulf %5, %6 : vector<1x128xf32>
    %c0_2 = arith.constant 0 : index
    %c0_3 = arith.constant 0 : index
    %8 = vector.load %arg3[%c0_2, %c0_3] : memref<1x128xf32, #tpu.memory_space<vmem>>, vector<1x128xf32>
    %9 = vector.broadcast %1 : f32 to vector<1x128xf32>
    %10 = arith.mulf %8, %9 : vector<1x128xf32>
    %11 = arith.addf %7, %10 : vector<1x128xf32>
    %12 = vector.broadcast %2 : f32 to vector<1x128xf32>
    %13 = arith.addf %11, %12 : vector<1x128xf32>
    %14 = math.tanh %13 : vector<1x128xf32>
    %15 = vector.broadcast %3 : f32 to vector<1x128xf32>
    %16 = arith.mulf %15, %14 : vector<1x128xf32>
    %17 = vector.broadcast %4 : f32 to vector<1x128xf32>
    %18 = arith.addf %16, %17 : vector<1x128xf32>
    %c0_4 = arith.constant 0 : index
    %c0_5 = arith.constant 0 : index
    %19 = vector.load %arg4[%c0_4, %c0_5] : memref<1x128xf32, #tpu.memory_space<vmem>>, vector<1x128xf32>
    tpu.vector_store %arg4[%c0_4, %c0_5], %18 {strides = array<i32>} : memref<1x128xf32, #tpu.memory_space<vmem>>, vector<1x128xf32>,
    return
  }
  func.func @transform_0(%arg0: i32, %arg1: memref<5xf32, #tpu.memory_space<smem>>) -> (i32, i32) {
    %c0_i32 = arith.constant 0 : i32
    %c0_i32_0 = arith.constant 0 : i32
    return %arg0, %c0_i32 : i32, i32
  }
  func.func @transform_1(%arg0: i32, %arg1: memref<5xf32, #tpu.memory_space<smem>>) -> (i32, i32) {
    %c0_i32 = arith.constant 0 : i32
    %c0_i32_0 = arith.constant 0 : i32
    return %arg0, %c0_i32 : i32, i32
  }
  func.func @transform_2(%arg0: i32, %arg1: memref<5xf32, #tpu.memory_space<smem>>) -> (i32, i32) {
    %c0_i32 = arith.constant 0 : i32
    %c0_i32_0 = arith.constant 0 : i32
    return %arg0, %c0_i32 : i32, i32
  }
}

</mosaic_0001>

<llo_original>
// kernel: tpu_custom_call.1
$region0: #{tpu_custom_call.1}
  #allocation0 [shape = 'u32[]', space=smem, size = 0x4, offset = 0x4, fixed_abs, tag = 'smem constant byte address 0x4 - core index']
  #allocation1 [shape = 'u32[144,128]{1,0:T(1,128)}', space=vmem, size = 0x12000, scoped, tag = 'internal scratch']
  #allocation2 [shape = 's32[1]{0}', space=sflag, size = 0x4, scoped, tag = 'scoped memory for tpu_custom_call.1']
  #allocation3 [shape = 'u8[512]{0}', space=smem, size = 0x200, scoped, tag = 'prefetched SMEM operand 0']
  %s0 = inlined_call_operand.hbm [shape: f32[5], index: 0, kind: input, shape index: {}]
  %s1 = inlined_call_operand.vmem [shape: f32[1,128], index: 1, kind: input, shape index: {}]
  %s2 = inlined_call_operand.vmem [shape: f32[1,128], index: 2, kind: input, shape index: {}]
  %s3 = inlined_call_operand.hbm [shape: f32[1,128], index: 3, kind: output, shape index: {}]
  %s4 = sld [smem:[#allocation0]]
  $region18: #{tpu_custom_call.1} parent=0
    _
  %s6 = ssub.s32 1, %s4
  %s7 = scalar_select 0, %s6, %s4
  %9 = dma.hbm_to_smem %s0, 16, [#allocation3], [#allocation2]
  %10 = dma.done [#allocation2], 16
  %11 = sfence
  $region1: #{tpu_custom_call.1} parent=0
    #allocation4 [shape = 'u8[512]{0}', space=vmem, size = 0x400, scoped, tag = 'output window, operand 0, single buffered']
    #allocation5 [shape = 's32[1]{0}', space=sflag, size = 0x4, scoped, tag = 'scoped memory for tpu_custom_call.1']
    %12 = vsyncpa [#allocation5], 0
    // Predicated region
    $region2: #{tpu_custom_call.1} parent=1 // pred_check
      _
    $region3: #{tpu_custom_call.1} parent=1 // pred_check_branch
      %14 = sbr.rel (0) target = $region5
    $region4: #{tpu_custom_call.1} parent=1 // pred_region
      _
    $region5: #{tpu_custom_call.1} parent=1 // pred_fallthru
      _
    // Predicated region
    $region6: #{tpu_custom_call.1} parent=1 // pred_check
      _
    $region7: #{tpu_custom_call.1} parent=1 // pred_check_branch
      %16 = sbr.rel (0) target = $region9
    $region8: #{tpu_custom_call.1} parent=1 // pred_region
      _
    $region9: #{tpu_custom_call.1} parent=1 // pred_fallthru
      _
    %s17 = sld [smem:[#allocation3]]
    %s18 = sld [smem:[#allocation3 + $0x1]]
    %s19 = sld [smem:[#allocation3 + $0x2]]
    %s20 = sld [smem:[#allocation3 + $0x3]]
    %s21 = sld [smem:[#allocation3 + $0x4]]
    %v22 = vld [vmem:[%s1] sm:$0x1]
    %v23 = vstv %s17
    %v24 = vmul.f32 %v22, %v23
    %v25 = vld [vmem:[%s2] sm:$0x1]
    %v26 = vstv %s18
    %v27 = vmul.f32 %v25, %v26
    %v28 = vadd.f32 %v24, %v27
    %v29 = vstv %s19
    %v30 = vadd.f32 %v28, %v29
    %v31 = vtanh.pop %v30
    %v32 = vstv %s20
    %v33 = vmul.f32 %v32, %v31
    %v34 = vstv %s21
    %v35 = vadd.f32 %v33, %v34
    %36 = vst [vmem:[#allocation4] sm:$0x1] %v35
    // Predicated region
    $region10: #{tpu_custom_call.1} parent=1 // pred_check
      _
    $region11: #{tpu_custom_call.1} parent=1 // pred_check_branch
      %38 = sbr.rel (0) target = $region13
    $region12: #{tpu_custom_call.1} parent=1 // pred_region
      %s40 = ssub.s32 16, 16
      %41 = vsyncadd [#allocation5], %s40
      %s43 = sshll.u32 [#allocation4], 4
      %s44 = int_to_ptr.vmem [resolvable:$true] %s43
      %46 = dma.vmem_to_hbm [thread:$0]  %s44, 16, %s3, [#allocation5]
    $region13: #{tpu_custom_call.1} parent=1 // pred_fallthru
      _
    // Predicated region
    $region14: #{tpu_custom_call.1} parent=1 // pred_check
      _
    $region15: #{tpu_custom_call.1} parent=1 // pred_check_branch
      %48 = sbr.rel (0) target = $region17
    $region16: #{tpu_custom_call.1} parent=1 // pred_region
      %49 = dma.done [#allocation5], 16
    $region17: #{tpu_custom_call.1} parent=1 // pred_fallthru
      _
    %50 = vsyncpa [#allocation5], 1

</llo_original>
